<compile_context>
chip_gen: v6e
topology: v6e:2x2x1
jax: 0.10.0
libtpu: 0.0.40
codegen_flags: <defaults>
</compile_context>

<pallas_src>
import functools

import jax
import jax.numpy as jnp
from jax import lax
from jax.experimental import pallas as pl
from jax.experimental.pallas import tpu as pltpu

LANES = 128
TM_TARGET = 4096       # rows per block -> 4096*128*4B = 2 MiB f32 per input block
CHUNK_ROWS = 64        # rows per inner fori_loop step (8 vregs per f32 operand)
NSLICES = 2            # leading "parallel" grid axis (feeds both TCs on v7x)
SMOOTH = 1e-5


def _round_up(x, m):
    return ((x + m - 1) // m) * m


def _sublane_multiple(dtype):
    # (sublane, lane) packing: 4B dtypes -> 8 rows, 2B -> 16 rows, 1B -> 32 rows.
    return max(8, 32 // jnp.dtype(dtype).itemsize)


def _dice_partial_kernel(nvalid_ref, x_ref, t_ref, inter_ref, denom_ref, *,
                         tm, chunk, steps_per_slice):
    """Accumulate per-slice dice partial sums into the resident output blocks.

    inter_ref (8,128) f32: running sum of sigmoid(x) * t for this slice.
    denom_ref (8,128) f32: running sum of sigmoid(x) + t for this slice.
    """
    c = pl.program_id(0)          # parallel slice (megacore sharded on v7x)
    i = pl.program_id(1)          # sequential step within the slice

    @pl.when(i == 0)
    def _():
        inter_ref[...] = jnp.zeros_like(inter_ref)
        denom_ref[...] = jnp.zeros_like(denom_ref)

    n_valid = nvalid_ref[0]
    # Logical (unclamped) flat element offset of this tile.  int32 is fine for
    # n < 2**31 elements.
    tile_start = (c * steps_per_slice + i) * (tm * LANES)
    n_chunks = tm // chunk

    def accumulate(masked):
        def body(k, carry):
            inter, denom = carry
            r0 = pl.multiple_of(k * chunk, chunk)
            x = x_ref[pl.ds(r0, chunk), :].astype(jnp.float32)
            t = t_ref[pl.ds(r0, chunk), :].astype(jnp.float32)
            s = jax.nn.sigmoid(x)
            it = s * t
            de = s + t
            if masked:
                # Element-level validity vs. the true (unpadded) element count.
                # jnp.where also squashes any NaN/Inf garbage in the out-of-
                # bounds part of a boundary block.
                row = lax.broadcasted_iota(jnp.int32, (chunk, LANES), 0)
                lane = lax.broadcasted_iota(jnp.int32, (chunk, LANES), 1)
                flat = tile_start + (r0 + row) * LANES + lane
                ok = flat < n_valid
                it = jnp.where(ok, it, 0.0)
                de = jnp.where(ok, de, 0.0)
            # (chunk,128) -> (8,128) partial via pure elementwise vreg adds.
            inter = inter + jnp.sum(it.reshape(-1, 8, LANES), axis=0)
            denom = denom + jnp.sum(de.reshape(-1, 8, LANES), axis=0)
            return inter, denom

        inter, denom = lax.fori_loop(0, n_chunks, body,
                                     (inter_ref[...], denom_ref[...]))
        inter_ref[...] = inter
        denom_ref[...] = denom

    fully_valid = tile_start + tm * LANES <= n_valid

    @pl.when(fully_valid)                     # fast path: no per-element mask
    def _():
        accumulate(masked=False)

    @pl.when(jnp.logical_not(fully_valid))    # boundary / padded grid step
    def _():
        accumulate(masked=True)


def dice_loss(inputs, targets, smooth=SMOOTH, *, tm_target=TM_TARGET):
    """DiceLoss.forward: 1 - (2*sum(sig(x)*t)+s) / (sum(sig(x)) + sum(t) + s)."""
    assert inputs.shape == targets.shape
    n = inputs.size
    assert n > 0

    x_flat = inputs.reshape(-1)     # row-major flatten, native dtype (no copy)
    t_flat = targets.reshape(-1)

    # The stream is viewed as a (rows, 128) lane-major slab.  Only if n is not
    # a multiple of 128 do we pad minimally (values irrelevant: the kernel
    # masks everything past the true element count).
    if n % LANES:
        pad = LANES - n % LANES
        x_flat = jnp.pad(x_flat, (0, pad))
        t_flat = jnp.pad(t_flat, (0, pad))
    rows = x_flat.size // LANES

    # Row tile: large (2 MiB f32) to amortize per-step overhead, rounded so the
    # inner chunk and the (sublane,lane) packing of both dtypes divide it.
    sub = max(_sublane_multiple(inputs.dtype), _sublane_multiple(targets.dtype))
    tm = min(int(tm_target), _round_up(rows, sub))
    tm = _round_up(tm, sub)
    chunk = min(CHUNK_ROWS, tm)
    chunk = min(_round_up(chunk, sub), tm)
    tm = _round_up(tm, chunk)

    total_blocks = -(-rows // tm)                         # ceil
    nslices = NSLICES if total_blocks >= NSLICES else 1
    steps_per_slice = -(-total_blocks // nslices)         # ceil

    x2 = x_flat.reshape(rows, LANES)
    t2 = t_flat.reshape(rows, LANES)
    n_valid = jnp.array([n], dtype=jnp.int32)             # scalar prefetch (SMEM)

    def in_map(c, i, nvalid_ref):
        blk = c * steps_per_slice + i
        # Clamp so padded (fully out-of-range) grid steps re-read a valid block
        # instead of issuing an out-of-bounds DMA; their contribution is masked
        # to zero inside the kernel (tile_start uses the unclamped index).
        return (jnp.minimum(blk, total_blocks - 1), 0)

    def out_map(c, i, nvalid_ref):
        return (c, 0)

    inter, denom = pl.pallas_call(
        functools.partial(_dice_partial_kernel, tm=tm, chunk=chunk,
                          steps_per_slice=steps_per_slice),
        out_shape=(
            jax.ShapeDtypeStruct((nslices * 8, LANES), jnp.float32),
            jax.ShapeDtypeStruct((nslices * 8, LANES), jnp.float32),
        ),
        grid_spec=pltpu.PrefetchScalarGridSpec(
            num_scalar_prefetch=1,
            grid=(nslices, steps_per_slice),
            in_specs=[
                pl.BlockSpec((tm, LANES), in_map),
                pl.BlockSpec((tm, LANES), in_map),
            ],
            out_specs=[
                pl.BlockSpec((8, LANES), out_map),
                pl.BlockSpec((8, LANES), out_map),
            ],
        ),
        compiler_params=pltpu.CompilerParams(
            dimension_semantics=("parallel", "arbitrary"),
        ),
    )(n_valid, x2, t2)

    # Tiny final combine (2 x nslices*8*128 f32) + dice in plain JAX.
    inter_sum = jnp.sum(inter)
    denom_sum = jnp.sum(denom)
    dice = (2.0 * inter_sum + smooth) / (denom_sum + smooth)
    return 1.0 - dice


def _reference_dice_loss(inputs, targets, smooth=SMOOTH):
    """Pure-JAX reference mirroring the PyTorch DiceLoss module."""
    s = jax.nn.sigmoid(inputs.astype(jnp.float32)).reshape(-1)
    t = targets.astype(jnp.float32).reshape(-1)
    inter = jnp.sum(s * t)
    dice = (2.0 * inter + smooth) / (jnp.sum(s) + jnp.sum(t) + smooth)
    return 1.0 - dice


if __name__ == "__main__":
    key = jax.random.PRNGKey(0)
    k1, k2, k3, k4, k5, k6 = jax.random.split(key, 6)

    # Primary shape implied by the module: NCHW logits + binary mask.
    x = jax.random.normal(k1, (2, 4, 16, 16), dtype=jnp.float32)
    t = (jax.random.uniform(k2, (2, 4, 16, 16)) > 0.5).astype(jnp.float32)
    loss = jax.block_until_ready(dice_loss(x, t))
    ref = _reference_dice_loss(x, t)
    assert jnp.allclose(loss, ref, atol=2e-5, rtol=2e-5), (loss, ref)

    # Unaligned element count: exercises the scalar-prefetch count + in-kernel
    # tail masking (no tile-sized padding pass).
    x2 = jax.random.normal(k3, (3, 5, 50), dtype=jnp.float32)
    t2 = (jax.random.uniform(k4, (3, 5, 50)) > 0.5).astype(jnp.float32)
    loss2 = jax.block_until_ready(dice_loss(x2, t2))
    ref2 = _reference_dice_loss(x2, t2)
    assert jnp.allclose(loss2, ref2, atol=2e-5, rtol=2e-5), (loss2, ref2)

    # Multi-block / dual-slice path with a small row tile: exercises the
    # parallel grid axis, the partial boundary block and the clamped padded
    # grid step.
    x3 = jax.random.normal(k5, (40, 128), dtype=jnp.float32)
    t3 = (jax.random.uniform(k6, (40, 128)) > 0.5).astype(jnp.float32)
    loss3 = jax.block_until_ready(dice_loss(x3, t3, tm_target=16))
    ref3 = _reference_dice_loss(x3, t3)
    assert jnp.allclose(loss3, ref3, atol=2e-5, rtol=2e-5), (loss3, ref3)

    print("KERNEL_OK")
</pallas_src>

<mosaic_0001>
module attributes {stable_mosaic.version = 11 : i64} {
  func.func @_dice_partial_kernel(%arg0: i32, %arg1: i32, %arg2: memref<1xi32, #tpu.memory_space<smem>>, %arg3: memref<16x128xf32, #tpu.memory_space<vmem>>, %arg4: memref<16x128xf32, #tpu.memory_space<vmem>>, %arg5: memref<8x128xf32, #tpu.memory_space<vmem>>, %arg6: memref<8x128xf32, #tpu.memory_space<vmem>>) attributes {dimension_semantics = [#tpu.dimension_semantics<parallel>, #tpu.dimension_semantics<arbitrary>], iteration_bounds = array<i64: 1, 1>, scalar_prefetch = 1 : i64, scratch_operands = 0 : i64, tpu.core_type = #tpu.core_type<tc>, window_params = [{transform_indices = @transform_0, window_bounds = array<i64: 16, 128>}, {transform_indices = @transform_1, window_bounds = array<i64: 16, 128>}, {transform_indices = @transform_2, window_bounds = array<i64: 8, 128>}, {transform_indices = @transform_3, window_bounds = array<i64: 8, 128>}]} {
    %c0_i32 = arith.constant 0 : i32
    %0 = arith.cmpi eq, %arg1, %c0_i32 : i32
    %1 = arith.extui %0 : i1 to i32
    %c0_i32_0 = arith.constant 0 : i32
    %2 = arith.cmpi ne, %1, %c0_i32_0 : i32
    scf.if %2 {
      %cst = arith.constant 0.000000e+00 : f32
      %14 = vector.broadcast %cst : f32 to vector<8x128xf32>
      %c0_4 = arith.constant 0 : index
      %c0_5 = arith.constant 0 : index
      %15 = vector.load %arg5[%c0_4, %c0_5] : memref<8x128xf32, #tpu.memory_space<vmem>>, vector<8x128xf32>
      tpu.vector_store %arg5[%c0_4, %c0_5], %14 {strides = array<i32>} : memref<8x128xf32, #tpu.memory_space<vmem>>, vector<8x128xf32>,
      %cst_6 = arith.constant 0.000000e+00 : f32
      %16 = vector.broadcast %cst_6 : f32 to vector<8x128xf32>
      %c0_7 = arith.constant 0 : index
      %c0_8 = arith.constant 0 : index
      %17 = vector.load %arg6[%c0_7, %c0_8] : memref<8x128xf32, #tpu.memory_space<vmem>>, vector<8x128xf32>
      tpu.vector_store %arg6[%c0_7, %c0_8], %16 {strides = array<i32>} : memref<8x128xf32, #tpu.memory_space<vmem>>, vector<8x128xf32>,
    } else {
    }
    %c0 = arith.constant 0 : index
    %3 = memref.load %arg2[%c0] : memref<1xi32, #tpu.memory_space<smem>>
    %c1_i32 = arith.constant 1 : i32
    %4 = arith.muli %arg0, %c1_i32 : i32
    %5 = arith.addi %4, %arg1 : i32
    %c2048_i32 = arith.constant 2048 : i32
    %6 = arith.muli %5, %c2048_i32 : i32
    %c2048_i32_1 = arith.constant 2048 : i32
    %7 = arith.addi %6, %c2048_i32_1 : i32
    %8 = arith.cmpi sle, %7, %3 : i32
    %9 = arith.extui %8 : i1 to i32
    %c0_i32_2 = arith.constant 0 : i32
    %10 = arith.cmpi ne, %9, %c0_i32_2 : i32
    scf.if %10 {
      %c0_4 = arith.constant 0 : index
      %c0_5 = arith.constant 0 : index
      %14 = vector.load %arg5[%c0_4, %c0_5] : memref<8x128xf32, #tpu.memory_space<vmem>>, vector<8x128xf32>
      %c0_6 = arith.constant 0 : index
      %c0_7 = arith.constant 0 : index
      %15 = vector.load %arg6[%c0_6, %c0_7] : memref<8x128xf32, #tpu.memory_space<vmem>>, vector<8x128xf32>
      %c0_i32_8 = arith.constant 0 : i32
      %c16_i32 = arith.constant 16 : i32
      %16 = arith.muli %c0_i32_8, %c16_i32 : i32
      %17 = tpu.assume_multiple %16, 16 : i32
      %18 = arith.index_cast %17 : i32 to index
      %c0_9 = arith.constant 0 : index
      %19 = vector.load %arg3[%18, %c0_9] : memref<16x128xf32, #tpu.memory_space<vmem>>, vector<16x128xf32>
      %20 = arith.index_cast %17 : i32 to index
      %c0_10 = arith.constant 0 : index
      %21 = vector.load %arg4[%20, %c0_10] : memref<16x128xf32, #tpu.memory_space<vmem>>, vector<16x128xf32>
      %22 = arith.negf %19 : vector<16x128xf32>
      %23 = math.exp %22 : vector<16x128xf32>
      %cst = arith.constant 1.000000e+00 : f32
      %24 = vector.broadcast %cst : f32 to vector<16x128xf32>
      %25 = arith.addf %24, %23 : vector<16x128xf32>
      %26 = arith.divf %24, %25 : vector<16x128xf32>
      %27 = arith.mulf %26, %21 : vector<16x128xf32>
      %28 = arith.addf %26, %21 : vector<16x128xf32>
      %29 = vector.shape_cast %27 : vector<16x128xf32> to vector<2x8x128xf32>
      %cst_11 = arith.constant dense<0.000000e+00> : vector<8x128xf32>
      %30 = vector.multi_reduction <add>, %29, %cst_11 [0] : vector<2x8x128xf32> to vector<8x128xf32>
      %31 = arith.addf %14, %30 : vector<8x128xf32>
      %32 = vector.shape_cast %28 : vector<16x128xf32> to vector<2x8x128xf32>
      %cst_12 = arith.constant dense<0.000000e+00> : vector<8x128xf32>
      %33 = vector.multi_reduction <add>, %32, %cst_12 [0] : vector<2x8x128xf32> to vector<8x128xf32>
      %34 = arith.addf %15, %33 : vector<8x128xf32>
      %c1_i32_13 = arith.constant 1 : i32
      %c0_14 = arith.constant 0 : index
      %c0_15 = arith.constant 0 : index
      %35 = vector.load %arg5[%c0_14, %c0_15] : memref<8x128xf32, #tpu.memory_space<vmem>>, vector<8x128xf32>
      tpu.vector_store %arg5[%c0_14, %c0_15], %31 {strides = array<i32>} : memref<8x128xf32, #tpu.memory_space<vmem>>, vector<8x128xf32>,
      %c0_16 = arith.constant 0 : index
      %c0_17 = arith.constant 0 : index
      %36 = vector.load %arg6[%c0_16, %c0_17] : memref<8x128xf32, #tpu.memory_space<vmem>>, vector<8x128xf32>
      tpu.vector_store %arg6[%c0_16, %c0_17], %34 {strides = array<i32>} : memref<8x128xf32, #tpu.memory_space<vmem>>, vector<8x128xf32>,
    } else {
    }
    %true = arith.constant true
    %11 = arith.xori %8, %true : i1
    %12 = arith.extui %11 : i1 to i32
    %c0_i32_3 = arith.constant 0 : i32
    %13 = arith.cmpi ne, %12, %c0_i32_3 : i32
    scf.if %13 {
      %c0_4 = arith.constant 0 : index
      %c0_5 = arith.constant 0 : index
      %14 = vector.load %arg5[%c0_4, %c0_5] : memref<8x128xf32, #tpu.memory_space<vmem>>, vector<8x128xf32>
      %c0_6 = arith.constant 0 : index
      %c0_7 = arith.constant 0 : index
      %15 = vector.load %arg6[%c0_6, %c0_7] : memref<8x128xf32, #tpu.memory_space<vmem>>, vector<8x128xf32>
      %c0_i32_8 = arith.constant 0 : i32
      %c16_i32 = arith.constant 16 : i32
      %16 = arith.muli %c0_i32_8, %c16_i32 : i32
      %17 = tpu.assume_multiple %16, 16 : i32
      %18 = arith.index_cast %17 : i32 to index
      %c0_9 = arith.constant 0 : index
      %19 = vector.load %arg3[%18, %c0_9] : memref<16x128xf32, #tpu.memory_space<vmem>>, vector<16x128xf32>
      %20 = arith.index_cast %17 : i32 to index
      %c0_10 = arith.constant 0 : index
      %21 = vector.load %arg4[%20, %c0_10] : memref<16x128xf32, #tpu.memory_space<vmem>>, vector<16x128xf32>
      %22 = arith.negf %19 : vector<16x128xf32>
      %23 = math.exp %22 : vector<16x128xf32>
      %cst = arith.constant 1.000000e+00 : f32
      %24 = vector.broadcast %cst : f32 to vector<16x128xf32>
      %25 = arith.addf %24, %23 : vector<16x128xf32>
      %26 = arith.divf %24, %25 : vector<16x128xf32>
      %27 = arith.mulf %26, %21 : vector<16x128xf32>
      %28 = arith.addf %26, %21 : vector<16x128xf32>
      %29 = tpu.iota {dimensions = array<i32: 0>} : vector<16x128xi32>
      %30 = tpu.iota {dimensions = array<i32: 1>} : vector<16x128xi32>
      %31 = vector.broadcast %17 : i32 to vector<16x128xi32>
      %32 = arith.addi %31, %29 : vector<16x128xi32>
      %c128_i32 = arith.constant 128 : i32
      %33 = vector.broadcast %c128_i32 : i32 to vector<16x128xi32>
      %34 = arith.muli %32, %33 : vector<16x128xi32>
      %35 = vector.broadcast %6 : i32 to vector<16x128xi32>
      %36 = arith.addi %35, %34 : vector<16x128xi32>
      %37 = arith.addi %36, %30 : vector<16x128xi32>
      %38 = vector.broadcast %3 : i32 to vector<16x128xi32>
      %39 = arith.cmpi slt, %37, %38 : vector<16x128xi32>
      %cst_11 = arith.constant 0.000000e+00 : f32
      %40 = vector.broadcast %cst_11 : f32 to vector<16x128xf32>
      %41 = arith.select %39, %27, %40 : vector<16x128xi1>, vector<16x128xf32>
      %cst_12 = arith.constant 0.000000e+00 : f32
      %42 = vector.broadcast %cst_12 : f32 to vector<16x128xf32>
      %43 = arith.select %39, %28, %42 : vector<16x128xi1>, vector<16x128xf32>
      %44 = vector.shape_cast %41 : vector<16x128xf32> to vector<2x8x128xf32>
      %cst_13 = arith.constant dense<0.000000e+00> : vector<8x128xf32>
      %45 = vector.multi_reduction <add>, %44, %cst_13 [0] : vector<2x8x128xf32> to vector<8x128xf32>
      %46 = arith.addf %14, %45 : vector<8x128xf32>
      %47 = vector.shape_cast %43 : vector<16x128xf32> to vector<2x8x128xf32>
      %cst_14 = arith.constant dense<0.000000e+00> : vector<8x128xf32>
      %48 = vector.multi_reduction <add>, %47, %cst_14 [0] : vector<2x8x128xf32> to vector<8x128xf32>
      %49 = arith.addf %15, %48 : vector<8x128xf32>
      %c1_i32_15 = arith.constant 1 : i32
      %c0_16 = arith.constant 0 : index
      %c0_17 = arith.constant 0 : index
      %50 = vector.load %arg5[%c0_16, %c0_17] : memref<8x128xf32, #tpu.memory_space<vmem>>, vector<8x128xf32>
      tpu.vector_store %arg5[%c0_16, %c0_17], %46 {strides = array<i32>} : memref<8x128xf32, #tpu.memory_space<vmem>>, vector<8x128xf32>,
      %c0_18 = arith.constant 0 : index
      %c0_19 = arith.constant 0 : index
      %51 = vector.load %arg6[%c0_18, %c0_19] : memref<8x128xf32, #tpu.memory_space<vmem>>, vector<8x128xf32>
      tpu.vector_store %arg6[%c0_18, %c0_19], %49 {strides = array<i32>} : memref<8x128xf32, #tpu.memory_space<vmem>>, vector<8x128xf32>,
    } else {
    }
    return
  }
  func.func @transform_0(%arg0: i32, %arg1: i32, %arg2: memref<1xi32, #tpu.memory_space<smem>>) -> (i32, i32) {
    %c1_i32 = arith.constant 1 : i32
    %0 = arith.muli %arg0, %c1_i32 : i32
    %1 = arith.addi %0, %arg1 : i32
    %c0_i32 = arith.constant 0 : i32
    %2 = arith.minsi %1, %c0_i32 : i32
    %c0_i32_0 = arith.constant 0 : i32
    %c0_i32_1 = arith.constant 0 : i32
    return %2, %c0_i32_0 : i32, i32
  }
  func.func @transform_1(%arg0: i32, %arg1: i32, %arg2: memref<1xi32, #tpu.memory_space<smem>>) -> (i32, i32) {
    %c1_i32 = arith.constant 1 : i32
    %0 = arith.muli %arg0, %c1_i32 : i32
    %1 = arith.addi %0, %arg1 : i32
    %c0_i32 = arith.constant 0 : i32
    %2 = arith.minsi %1, %c0_i32 : i32
    %c0_i32_0 = arith.constant 0 : i32
    %c0_i32_1 = arith.constant 0 : i32
    return %2, %c0_i32_0 : i32, i32
  }
  func.func @transform_2(%arg0: i32, %arg1: i32, %arg2: memref<1xi32, #tpu.memory_space<smem>>) -> (i32, i32) {
    %c0_i32 = arith.constant 0 : i32
    %c0_i32_0 = arith.constant 0 : i32
    return %arg0, %c0_i32 : i32, i32
  }
  func.func @transform_3(%arg0: i32, %arg1: i32, %arg2: memref<1xi32, #tpu.memory_space<smem>>) -> (i32, i32) {
    %c0_i32 = arith.constant 0 : i32
    %c0_i32_0 = arith.constant 0 : i32
    return %arg0, %c0_i32 : i32, i32
  }
}

</mosaic_0001>

<llo_original>
// kernel: tpu_custom_call.1
$region0: #{tpu_custom_call.1}
  #allocation0 [shape = 'u32[]', space=smem, size = 0x4, offset = 0x4, fixed_abs, tag = 'smem constant byte address 0x4 - core index']
  #allocation1 [shape = 'u32[144,128]{1,0:T(1,128)}', space=vmem, size = 0x12000, scoped, tag = 'internal scratch']
  #allocation2 [shape = 's32[1]{0}', space=sflag, size = 0x4, scoped, tag = 'scoped memory for tpu_custom_call.1']
  #allocation3 [shape = 's32[1]{0:T(128)S(6)}', space=smem, size = 0x200, scoped, tag = 'prefetched SMEM operand 0']
  %s0 = inlined_call_operand.<no memory space> [shape: s32[1], index: 0, kind: input, shape index: {}]
  %s1 = inlined_call_operand.hbm [shape: f32[16,128], index: 1, kind: input, shape index: {}]
  %s2 = inlined_call_operand.hbm [shape: f32[16,128], index: 2, kind: input, shape index: {}]
  %s3 = inlined_call_operand.hbm [shape: f32[8,128], index: 3, kind: output, shape index: {0}]
  %s4 = inlined_call_operand.hbm [shape: f32[8,128], index: 4, kind: output, shape index: {1}]
  %5 = xla_tuple %s3, %s4
  %s6 = sld [smem:[#allocation0]]
  $region46: #{tpu_custom_call.1} parent=0
    _
  %s8 = ssub.s32 1, %s6
  %s9 = scalar_select 0, %s8, %s6
  %10 = sst [smem:[#allocation3]] %s0
  $region1: #{tpu_custom_call.1} parent=0
    #allocation4 [shape = 'u8[8192]{0}', space=vmem, size = 0x2000, scoped, tag = 'input window, operand 1, single buffered']
    #allocation5 [shape = 's32[1]{0}', space=sflag, size = 0x4, scoped, tag = 'scoped memory for tpu_custom_call.1']
    #allocation6 [shape = 's32[1]{0}', space=sflag, size = 0x4, scoped, tag = 'scoped memory for tpu_custom_call.1']
    #allocation7 [shape = 'u8[8192]{0}', space=vmem, size = 0x2000, scoped, tag = 'input window, operand 2, single buffered']
    #allocation8 [shape = 's32[1]{0}', space=sflag, size = 0x4, scoped, tag = 'scoped memory for tpu_custom_call.1']
    #allocation9 [shape = 'u8[4096]{0}', space=vmem, size = 0x1000, scoped, tag = 'output window, operand 0, single buffered']
    #allocation10 [shape = 'u8[4096]{0}', space=vmem, size = 0x1000, scoped, tag = 'output window, operand 1, single buffered']
    #allocation11 [shape = 's32[1]{0}', space=sflag, size = 0x4, scoped, tag = 'scoped memory for tpu_custom_call.1']
    %11 = vsyncpa [#allocation5], 0
    %12 = vsyncpa [#allocation8], 0
    %13 = vsyncpa [#allocation6], 0
    %14 = vsyncpa [#allocation11], 0
    // Predicated region
    $region2: #{tpu_custom_call.1} parent=1 // pred_check
      _
    $region3: #{tpu_custom_call.1} parent=1 // pred_check_branch
      %16 = sbr.rel (0) target = $region5
    $region4: #{tpu_custom_call.1} parent=1 // pred_region
      %s17 = sadd.s32 0, 0
      %p18 = scmp.lt.s32.totalorder %s17, 0
      %s19 = scalar_select %p18, %s17, 0
      %s20 = smul.u32 2, %s19
      %s22 = ssub.s32 256, 256
      %23 = vsyncadd [#allocation5], %s22
      %s24 = smul.addr %s20, 128
      %s25 = scalar_lea.hbm %s1, %s24
      %s26 = sshll.u32 [#allocation4], 4
      %s27 = int_to_ptr.vmem [resolvable:$true] %s26
      %32 = dma.hbm_to_vmem [thread:$0]  %s25, 256, %s27, [#allocation5], 128, 128, 8
    $region5: #{tpu_custom_call.1} parent=1 // pred_fallthru
      _
    // Predicated region
    $region6: #{tpu_custom_call.1} parent=1 // pred_check
      _
    $region7: #{tpu_custom_call.1} parent=1 // pred_check_branch
      %34 = sbr.rel (0) target = $region9
    $region8: #{tpu_custom_call.1} parent=1 // pred_region
      %s35 = sadd.s32 0, 0
      %p36 = scmp.lt.s32.totalorder %s35, 0
      %s37 = scalar_select %p36, %s35, 0
      %s38 = smul.u32 2, %s37
      %s40 = ssub.s32 256, 256
      %41 = vsyncadd [#allocation8], %s40
      %s42 = smul.addr %s38, 128
      %s43 = scalar_lea.hbm %s2, %s42
      %s44 = sshll.u32 [#allocation7], 4
      %s45 = int_to_ptr.vmem [resolvable:$true] %s44
      %50 = dma.hbm_to_vmem [thread:$0]  %s43, 256, %s45, [#allocation8], 128, 128, 8
    $region9: #{tpu_custom_call.1} parent=1 // pred_fallthru
      _
    // Predicated region
    $region10: #{tpu_custom_call.1} parent=1 // pred_check
      _
    $region11: #{tpu_custom_call.1} parent=1 // pred_check_branch
      %52 = sbr.rel (0) target = $region13
    $region12: #{tpu_custom_call.1} parent=1 // pred_region
      %53 = dma.done [#allocation5], 256
    $region13: #{tpu_custom_call.1} parent=1 // pred_fallthru
      _
    // Predicated region
    $region14: #{tpu_custom_call.1} parent=1 // pred_check
      _
    $region15: #{tpu_custom_call.1} parent=1 // pred_check_branch
      %55 = sbr.rel (0) target = $region17
    $region16: #{tpu_custom_call.1} parent=1 // pred_region
      %56 = dma.done [#allocation8], 256
    $region17: #{tpu_custom_call.1} parent=1 // pred_fallthru
      _
    %s57 = sadd.s32 0, 0
    %p58 = scmp.lt.s32.totalorder %s57, 0
    %s59 = scalar_select %p58, %s57, 0
    %s60 = smul.u32 2, %s59
    %s61 = sadd.s32 0, 0
    %p62 = scmp.lt.s32.totalorder %s61, 0
    %s63 = scalar_select %p62, %s61, 0
    %s64 = smul.u32 2, %s63
    %p65 = scmp.eq.s32.totalorder 0, 0
    // Predicated region
    $region18: #{tpu_custom_call.1} parent=1 // pred_check
      %p66 = pneg %p65
    $region19: #{tpu_custom_call.1} parent=1 // pred_check_branch
      %68 = sbr.rel (%p66) target = $region21
    $region20: #{tpu_custom_call.1} parent=1 // pred_region
      %69 = vst [vmem:[#allocation9] sm:$0xff] 0.0
      %70 = vst [vmem:[#allocation10] sm:$0xff] 0.0
    $region21: #{tpu_custom_call.1} parent=1 // pred_fallthru
      _
    %s71 = sld [smem:[#allocation3]]
    %s72 = sadd.s32 0, 0
    %s73 = smul.u32 %s72, 2048
    %s74 = sadd.s32 %s73, 2048
    %p75 = scmp.le.s32.totalorder %s74, %s71
    // Predicated region
    $region22: #{tpu_custom_call.1} parent=1 // pred_check
      %p76 = pneg %p75
    $region23: #{tpu_custom_call.1} parent=1 // pred_check_branch
      %78 = sbr.rel (%p76) target = $region25
    $region24: #{tpu_custom_call.1} parent=1 // pred_region
      %v79 = vld [vmem:[#allocation9] sm:$0xff]
      %v80 = vld [vmem:[#allocation10] sm:$0xff]
      %v81 = vld [vmem:[#allocation4] sm:$0xff]
      %v82 = vld [vmem:[#allocation4 + $0x8] sm:$0xff]
      %v83 = vld [vmem:[#allocation7] sm:$0xff]
      %v84 = vld [vmem:[#allocation7 + $0x8] sm:$0xff]
      %v85 = vxor.u32 %v81, 2147483648
      %v86 = vxor.u32 %v82, 2147483648
      %v87 = vmul.f32 %v85, 1.442695
      %v88 = vpow.pop %v87
      %v89 = vmul.f32 %v86, 1.442695
      %v90 = vpow.pop %v89
      %v91 = vadd.f32 %v88, 1.0
      %v92 = vadd.f32 %v90, 1.0
      %v93 = vrcp.pop %v91
      %v94 = vmul.f32 1.0, %v93
      %v95 = vrcp.pop %v92
      %v96 = vmul.f32 1.0, %v95
      %v97 = vmul.f32 %v94, %v83
      %v98 = vmul.f32 %v96, %v84
      %v99 = vadd.f32 %v94, %v83
      %v100 = vadd.f32 %v96, %v84
      %v101 = vadd.f32 %v97, %v98
      %v102 = vadd.f32 %v79, %v101
      %v103 = vadd.f32 %v99, %v100
      %v104 = vadd.f32 %v80, %v103
      %105 = vst [vmem:[#allocation9] sm:$0xff] %v102
      %106 = vst [vmem:[#allocation10] sm:$0xff] %v104
    $region25: #{tpu_custom_call.1} parent=1 // pred_fallthru
      _
    %p107 = scmp.gt.s32.totalorder %s74, %s71
    // Predicated region
    $region26: #{tpu_custom_call.1} parent=1 // pred_check
      %p108 = pneg %p107
    $region27: #{tpu_custom_call.1} parent=1 // pred_check_branch
      %110 = sbr.rel (%p108) target = $region29
    $region28: #{tpu_custom_call.1} parent=1 // pred_region
      %v111 = vld [vmem:[#allocation9] sm:$0xff]
      %v112 = vld [vmem:[#allocation10] sm:$0xff]
      %v113 = vld [vmem:[#allocation4] sm:$0xff]
      %v114 = vld [vmem:[#allocation4 + $0x8] sm:$0xff]
      %v115 = vld [vmem:[#allocation7] sm:$0xff]
      %v116 = vld [vmem:[#allocation7 + $0x8] sm:$0xff]
      %v117 = vxor.u32 %v113, 2147483648
      %v118 = vxor.u32 %v114, 2147483648
      %v119 = vmul.f32 %v117, 1.442695
      %v120 = vpow.pop %v119
      %v121 = vmul.f32 %v118, 1.442695
      %v122 = vpow.pop %v121
      %v123 = vadd.f32 %v120, 1.0
      %v124 = vadd.f32 %v122, 1.0
      %v125 = vrcp.pop %v123
      %v126 = vmul.f32 1.0, %v125
      %v127 = vrcp.pop %v124
      %v128 = vmul.f32 1.0, %v127
      %v129 = vmul.f32 %v126, %v115
      %v130 = vmul.f32 %v128, %v116
      %v131 = vadd.f32 %v126, %v115
      %v132 = vadd.f32 %v128, %v116
      %v133 = vlaneseq
      %v134 = vshrl.u32 %v133, 7
      %v135 = vadd.s32 %v134, 8
      %v136 = vlaneseq
      %v137 = vand.u32 %v136, 127
      %v138 = vstv 0
      %v139 = vadd.s32 %v138, %v134
      %v140 = vadd.s32 %v138, %v135
      %v141 = vmul.u32 %v139, 128
      %v142 = vmul.u32 %v140, 128
      %v143 = vstv %s73
      %v144 = vadd.s32 %v143, %v141
      %v145 = vadd.s32 %v143, %v142
      %v146 = vadd.s32 %v144, %v137
      %v147 = vadd.s32 %v145, %v137
      %v148 = vstv %s71
      %vm149 = vcmp.lt.s32.totalorder %v146, %v148
      %vm150 = vcmp.lt.s32.totalorder %v147, %v148
      %v151 = vsel %vm149, %v129, 0.0
      %v152 = vsel %vm150, %v130, 0.0
      %v153 = vsel %vm149, %v131, 0.0
      %v154 = vsel %vm150, %v132, 0.0
      %v155 = vadd.f32 %v151, %v152
      %v156 = vadd.f32 %v111, %v155
      %v157 = vadd.f32 %v153, %v154
      %v158 = vadd.f32 %v112, %v157
      %159 = vst [vmem:[#allocation9] sm:$0xff] %v156
      %160 = vst [vmem:[#allocation10] sm:$0xff] %v158
    $region29: #{tpu_custom_call.1} parent=1 // pred_fallthru
      _
    // Predicated region
    $region30: #{tpu_custom_call.1} parent=1 // pred_check
      _
    $region31: #{tpu_custom_call.1} parent=1 // pred_check_branch
      %162 = sbr.rel (0) target = $region33
    $region32: #{tpu_custom_call.1} parent=1 // pred_region
      %s164 = ssub.s32 128, 128
      %165 = vsyncadd [#allocation6], %s164
      %s167 = sshll.u32 [#allocation9], 4
      %s168 = int_to_ptr.vmem [resolvable:$true] %s167
      %170 = dma.vmem_to_hbm [thread:$0]  %s168, 128, %s3, [#allocation6]
    $region33: #{tpu_custom_call.1} parent=1 // pred_fallthru
      _
    // Predicated region
    $region34: #{tpu_custom_call.1} parent=1 // pred_check
      _
    $region35: #{tpu_custom_call.1} parent=1 // pred_check_branch
      %172 = sbr.rel (0) target = $region37
    $region36: #{tpu_custom_call.1} parent=1 // pred_region
      %s174 = ssub.s32 128, 128
      %175 = vsyncadd [#allocation11], %s174
      %s177 = sshll.u32 [#allocation10], 4
      %s178 = int_to_ptr.vmem [resolvable:$true] %s177
      %180 = dma.vmem_to_hbm [thread:$0]  %s178, 128, %s4, [#allocation11]
    $region37: #{tpu_custom_call.1} parent=1 // pred_fallthru
      _
    // Predicated region
    $region38: #{tpu_custom_call.1} parent=1 // pred_check
      _
    $region39: #{tpu_custom_call.1} parent=1 // pred_check_branch
      %182 = sbr.rel (0) target = $region41
    $region40: #{tpu_custom_call.1} parent=1 // pred_region
      %183 = dma.done [#allocation6], 128
    $region41: #{tpu_custom_call.1} parent=1 // pred_fallthru
      _
    // Predicated region
    $region42: #{tpu_custom_call.1} parent=1 // pred_check
      _
    $region43: #{tpu_custom_call.1} parent=1 // pred_check_branch
      %185 = sbr.rel (0) target = $region45
    $region44: #{tpu_custom_call.1} parent=1 // pred_region
      %186 = dma.done [#allocation11], 128
    $region45: #{tpu_custom_call.1} parent=1 // pred_fallthru
      _
    %187 = vsyncpa [#allocation5], 1
    %188 = vsyncpa [#allocation8], 1
    %189 = vsyncpa [#allocation6], 1
    %190 = vsyncpa [#allocation11], 1

</llo_original>
